<compile_context>
chip_gen: v7x
topology: tpu7x:2x2x1
jax: 0.10.0
libtpu: 0.0.40
codegen_flags: <defaults>
</compile_context>

<pallas_src>
import functools

import jax
import jax.numpy as jnp
from jax import lax
from jax.experimental import pallas as pl
from jax.experimental.pallas import tpu as pltpu

_LANE = 128
_ROW_ALIGN = 32                        # covers f32(8) / bf16(16) / int8(32) sublane packing
_NUM_PAR = 2                           # leading "parallel" grid axis (v7x: 2 TensorCores)
_TARGET_BLOCK_BYTES = 2 * 1024 * 1024  # ~2 MiB per input block (f32 worst case)
_VMEM_LIMIT_BYTES = 32 * 1024 * 1024   # 4 streams x 2 buffers x 2 MiB stays well under this


def _cdiv(a, b):
    return -(-a // b)


def _round_up(x, m):
    return _cdiv(x, m) * m


def _plan(total_elems, last_dim):
    """Choose a lane-dense (rows, width) view and a row tiling for the grid."""
    width = last_dim if (last_dim % _LANE == 0) else 4 * _LANE   # 512 fallback
    rows_data = _cdiv(total_elems, width)

    tile_rows = max(_ROW_ALIGN,
                    (_TARGET_BLOCK_BYTES // (width * 4)) // _ROW_ALIGN * _ROW_ALIGN)

    if rows_data < _NUM_PAR * tile_rows:
        # Small problem: shrink the tile and zero-pad rows so the grid covers
        # the array exactly (the pad copy is negligible at these sizes).
        tile_rows = max(_ROW_ALIGN, _round_up(_cdiv(rows_data, _NUM_PAR), _ROW_ALIGN))
        steps = 1
        rows_array = _NUM_PAR * steps * tile_rows
        needs_mask = False
    else:
        # Large problem: never pad rows in HBM (that would cost a full extra
        # pass); balance blocks across the two cores and mask the ragged tail
        # inside the kernel instead.
        nblocks = _round_up(_cdiv(rows_data, tile_rows), _NUM_PAR)
        tile_rows = max(_ROW_ALIGN, _round_up(_cdiv(rows_data, nblocks), _ROW_ALIGN))
        nblocks = _cdiv(rows_data, tile_rows)
        steps = _cdiv(nblocks, _NUM_PAR)
        rows_array = rows_data
        needs_mask = (_NUM_PAR * steps * tile_rows) != rows_array

    return width, rows_array, tile_rows, steps, needs_mask


def _prep(x, rows_array, width):
    """Flatten, zero-pad the tail, reshape to the lane-dense layout.

    Native dtype is preserved; the f32 cast happens inside the kernel."""
    if x.dtype == jnp.bool_:
        x = x.astype(jnp.float32)
    flat = x.reshape(-1)
    pad = rows_array * width - flat.shape[0]
    if pad:
        flat = jnp.pad(flat, (0, pad))
    return flat.reshape(rows_array, width)


def _make_dice_kernel(steps, tile_rows, width, rows_array, needs_mask, has_weights):
    def kernel(pred_ref, gt_ref, mask_ref, *rest):
        if has_weights:
            w_ref, out_ref = rest
        else:
            (out_ref,) = rest

        i = pl.program_id(1)

        @pl.when(i == 0)
        def _():
            out_ref[...] = jnp.zeros_like(out_ref)

        p = pred_ref[...].astype(jnp.float32)
        g = gt_ref[...].astype(jnp.float32)
        m = mask_ref[...].astype(jnp.float32)
        if has_weights:
            m = m * w_ref[...].astype(jnp.float32)

        if needs_mask:
            # Un-clamped block index: duplicate (clamped) blocks and the
            # ragged tail rows beyond the real array are zeroed out here.
            b = pl.program_id(0) * steps + i
            row = lax.broadcasted_iota(jnp.int32, (tile_rows, width), 0)
            keep = (b * tile_rows + row) < rows_array
            p = jnp.where(keep, p, 0.0)
            g = jnp.where(keep, g, 0.0)
            m = jnp.where(keep, m, 0.0)

        pm = p * m
        gm = g * m
        # Reduce only the row axis per step; cross-lane reduce is deferred.
        out_ref[0] += jnp.sum(pm * g, axis=0, keepdims=True)   # intersection term
        out_ref[1] += jnp.sum(pm, axis=0, keepdims=True)       # pred * mask
        out_ref[2] += jnp.sum(gm, axis=0, keepdims=True)       # gt * mask

    return kernel


@functools.partial(jax.jit, static_argnames=("eps",))
def dice_loss(pred, gt, mask, weights=None, eps=1e-6):
    """Pallas implementation of DBnet DiceLoss.forward.

    pred: (N, 1, H, W) or (N, H, W); gt: same; mask: (N, H, W);
    weights: optional (N, H, W).
    """
    if pred.ndim == 4:
        pred = pred[:, 0, :, :]
        gt = gt[:, 0, :, :]
    assert pred.shape == gt.shape == mask.shape
    has_weights = weights is not None
    if has_weights:
        assert weights.shape == mask.shape

    total = 1
    for d in pred.shape:
        total *= d
    width, rows_array, tile_rows, steps, needs_mask = _plan(total, pred.shape[-1])

    inputs = [_prep(pred, rows_array, width),
              _prep(gt, rows_array, width),
              _prep(mask, rows_array, width)]
    if has_weights:
        inputs.append(_prep(weights, rows_array, width))

    max_block = _cdiv(rows_array, tile_rows) - 1

    def row_index_map(par, i):
        # Clamp so the DMA never starts past the array; duplicate blocks are
        # masked to zero inside the kernel (un-clamped index check).
        return (jnp.minimum(par * steps + i, max_block), 0)

    row_spec = pl.BlockSpec((tile_rows, width), row_index_map)

    partial_sums = pl.pallas_call(
        _make_dice_kernel(steps, tile_rows, width, rows_array, needs_mask, has_weights),
        out_shape=jax.ShapeDtypeStruct((_NUM_PAR, 3, 1, width), jnp.float32),
        grid=(_NUM_PAR, steps),
        in_specs=[row_spec] * len(inputs),
        out_specs=pl.BlockSpec((None, 3, 1, width), lambda par, i: (par, 0, 0, 0)),
        compiler_params=pltpu.CompilerParams(
            dimension_semantics=("parallel", "arbitrary"),
            vmem_limit_bytes=_VMEM_LIMIT_BYTES,
        ),
    )(*inputs)

    sums = jnp.sum(partial_sums, axis=(0, 2, 3))   # tiny epilogue reduce -> (3,)
    intersection = sums[0]
    union = sums[1] + sums[2] + jnp.float32(eps)
    return 1.0 - 2.0 * intersection / union


def dice_loss_ref(pred, gt, mask, weights=None, eps=1e-6):
    """Pure-JAX reference mirroring the PyTorch module."""
    if pred.ndim == 4:
        pred = pred[:, 0, :, :]
        gt = gt[:, 0, :, :]
    if weights is not None:
        mask = weights * mask
    pred = pred.astype(jnp.float32)
    gt = gt.astype(jnp.float32)
    mask = mask.astype(jnp.float32)
    intersection = jnp.sum(pred * gt * mask)
    union = jnp.sum(pred * mask) + jnp.sum(gt * mask) + eps
    return 1.0 - 2.0 * intersection / union


if __name__ == "__main__":
    key = jax.random.PRNGKey(0)
    k1, k2, k3, k4 = jax.random.split(key, 4)

    N, H, W = 2, 16, 16
    # pred: sigmoid-like heatmap in [0, 1]; gt: binary map; mask: binary valid map
    pred = jax.nn.sigmoid(jax.random.normal(k1, (N, 1, H, W), jnp.float32))
    gt = (jax.random.uniform(k2, (N, 1, H, W)) > 0.5).astype(jnp.float32)
    mask = (jax.random.uniform(k3, (N, H, W)) > 0.2).astype(jnp.float32)
    weights = jax.random.uniform(k4, (N, H, W), jnp.float32)

    # No weights.
    loss = jax.block_until_ready(dice_loss(pred, gt, mask))
    ref = dice_loss_ref(pred, gt, mask)
    assert jnp.allclose(loss, ref, atol=1e-5, rtol=1e-5), (loss, ref)
    assert float(loss) <= 1.0

    # Fused weights path.
    loss_w = jax.block_until_ready(dice_loss(pred, gt, mask, weights))
    ref_w = dice_loss_ref(pred, gt, mask, weights)
    assert jnp.allclose(loss_w, ref_w, atol=1e-5, rtol=1e-5), (loss_w, ref_w)

    print("KERNEL_OK")
</pallas_src>

<mosaic_0001>
module attributes {stable_mosaic.version = 11 : i64} {
  func.func @kernel(%arg0: i32, %arg1: i32, %arg2: memref<32x512xf32, #tpu.memory_space<vmem>>, %arg3: memref<32x512xf32, #tpu.memory_space<vmem>>, %arg4: memref<32x512xf32, #tpu.memory_space<vmem>>, %arg5: memref<1x3x1x512xf32, #tpu.memory_space<vmem>>) attributes {dimension_semantics = [#tpu.dimension_semantics<parallel>, #tpu.dimension_semantics<arbitrary>], iteration_bounds = array<i64: 2, 1>, scalar_prefetch = 0 : i64, scratch_operands = 0 : i64, tpu.core_type = #tpu.core_type<tc>, window_params = [{transform_indices = @transform_0, window_bounds = array<i64: 32, 512>}, {transform_indices = @transform_1, window_bounds = array<i64: 32, 512>}, {transform_indices = @transform_2, window_bounds = array<i64: 32, 512>}, {transform_indices = @transform_3, window_bounds = array<i64: 1, 3, 1, 512>}]} {
    %c0_i32 = arith.constant 0 : i32
    %0 = arith.cmpi eq, %arg1, %c0_i32 : i32
    %1 = arith.extui %0 : i1 to i32
    %c0_i32_0 = arith.constant 0 : i32
    %2 = arith.cmpi ne, %1, %c0_i32_0 : i32
    scf.if %2 {
      %cst_30 = arith.constant 0.000000e+00 : f32
      %33 = vector.broadcast %cst_30 : f32 to vector<3x1x512xf32>
      %c0_31 = arith.constant 0 : index
      %c0_32 = arith.constant 0 : index
      %c0_33 = arith.constant 0 : index
      %c0_34 = arith.constant 0 : index
      %34 = vector.load %arg5[%c0_31, %c0_32, %c0_33, %c0_34] : memref<1x3x1x512xf32, #tpu.memory_space<vmem>>, vector<1x3x1x512xf32>
      %35 = vector.shape_cast %34 : vector<1x3x1x512xf32> to vector<3x1x512xf32>
      %36 = vector.shape_cast %33 : vector<3x1x512xf32> to vector<1x3x1x512xf32>
      tpu.vector_store %arg5[%c0_31, %c0_32, %c0_33, %c0_34], %36 {strides = array<i32>} : memref<1x3x1x512xf32, #tpu.memory_space<vmem>>, vector<1x3x1x512xf32>,
    } else {
    }
    %c0 = arith.constant 0 : index
    %c0_1 = arith.constant 0 : index
    %3 = vector.load %arg2[%c0, %c0_1] : memref<32x512xf32, #tpu.memory_space<vmem>>, vector<32x512xf32>
    %c0_2 = arith.constant 0 : index
    %c0_3 = arith.constant 0 : index
    %4 = vector.load %arg3[%c0_2, %c0_3] : memref<32x512xf32, #tpu.memory_space<vmem>>, vector<32x512xf32>
    %c0_4 = arith.constant 0 : index
    %c0_5 = arith.constant 0 : index
    %5 = vector.load %arg4[%c0_4, %c0_5] : memref<32x512xf32, #tpu.memory_space<vmem>>, vector<32x512xf32>
    %6 = arith.mulf %3, %5 : vector<32x512xf32>
    %7 = arith.mulf %4, %5 : vector<32x512xf32>
    %c0_6 = arith.constant 0 : index
    %c0_7 = arith.constant 0 : index
    %c0_8 = arith.constant 0 : index
    %c0_9 = arith.constant 0 : index
    %8 = vector.load %arg5[%c0_6, %c0_7, %c0_8, %c0_9] : memref<1x3x1x512xf32, #tpu.memory_space<vmem>>, vector<1x1x1x512xf32>
    %9 = vector.shape_cast %8 : vector<1x1x1x512xf32> to vector<1x512xf32>
    %10 = arith.mulf %6, %4 : vector<32x512xf32>
    %cst = arith.constant dense<0.000000e+00> : vector<512xf32>
    %11 = vector.multi_reduction <add>, %10, %cst [0] : vector<32x512xf32> to vector<512xf32>
    %12 = vector.shape_cast %11 : vector<512xf32> to vector<1x512xf32>
    %13 = arith.addf %9, %12 : vector<1x512xf32>
    %c0_10 = arith.constant 0 : index
    %c0_11 = arith.constant 0 : index
    %c0_12 = arith.constant 0 : index
    %c0_13 = arith.constant 0 : index
    %14 = vector.load %arg5[%c0_10, %c0_11, %c0_12, %c0_13] : memref<1x3x1x512xf32, #tpu.memory_space<vmem>>, vector<1x1x1x512xf32>
    %15 = vector.shape_cast %14 : vector<1x1x1x512xf32> to vector<1x512xf32>
    %16 = vector.shape_cast %13 : vector<1x512xf32> to vector<1x1x1x512xf32>
    tpu.vector_store %arg5[%c0_10, %c0_11, %c0_12, %c0_13], %16 {strides = array<i32>} : memref<1x3x1x512xf32, #tpu.memory_space<vmem>>, vector<1x1x1x512xf32>,
    %c0_14 = arith.constant 0 : index
    %c1 = arith.constant 1 : index
    %c0_15 = arith.constant 0 : index
    %c0_16 = arith.constant 0 : index
    %17 = vector.load %arg5[%c0_14, %c1, %c0_15, %c0_16] : memref<1x3x1x512xf32, #tpu.memory_space<vmem>>, vector<1x1x1x512xf32>
    %18 = vector.shape_cast %17 : vector<1x1x1x512xf32> to vector<1x512xf32>
    %cst_17 = arith.constant dense<0.000000e+00> : vector<512xf32>
    %19 = vector.multi_reduction <add>, %6, %cst_17 [0] : vector<32x512xf32> to vector<512xf32>
    %20 = vector.shape_cast %19 : vector<512xf32> to vector<1x512xf32>
    %21 = arith.addf %18, %20 : vector<1x512xf32>
    %c0_18 = arith.constant 0 : index
    %c1_19 = arith.constant 1 : index
    %c0_20 = arith.constant 0 : index
    %c0_21 = arith.constant 0 : index
    %22 = vector.load %arg5[%c0_18, %c1_19, %c0_20, %c0_21] : memref<1x3x1x512xf32, #tpu.memory_space<vmem>>, vector<1x1x1x512xf32>
    %23 = vector.shape_cast %22 : vector<1x1x1x512xf32> to vector<1x512xf32>
    %24 = vector.shape_cast %21 : vector<1x512xf32> to vector<1x1x1x512xf32>
    tpu.vector_store %arg5[%c0_18, %c1_19, %c0_20, %c0_21], %24 {strides = array<i32>} : memref<1x3x1x512xf32, #tpu.memory_space<vmem>>, vector<1x1x1x512xf32>,
    %c0_22 = arith.constant 0 : index
    %c2 = arith.constant 2 : index
    %c0_23 = arith.constant 0 : index
    %c0_24 = arith.constant 0 : index
    %25 = vector.load %arg5[%c0_22, %c2, %c0_23, %c0_24] : memref<1x3x1x512xf32, #tpu.memory_space<vmem>>, vector<1x1x1x512xf32>
    %26 = vector.shape_cast %25 : vector<1x1x1x512xf32> to vector<1x512xf32>
    %cst_25 = arith.constant dense<0.000000e+00> : vector<512xf32>
    %27 = vector.multi_reduction <add>, %7, %cst_25 [0] : vector<32x512xf32> to vector<512xf32>
    %28 = vector.shape_cast %27 : vector<512xf32> to vector<1x512xf32>
    %29 = arith.addf %26, %28 : vector<1x512xf32>
    %c0_26 = arith.constant 0 : index
    %c2_27 = arith.constant 2 : index
    %c0_28 = arith.constant 0 : index
    %c0_29 = arith.constant 0 : index
    %30 = vector.load %arg5[%c0_26, %c2_27, %c0_28, %c0_29] : memref<1x3x1x512xf32, #tpu.memory_space<vmem>>, vector<1x1x1x512xf32>
    %31 = vector.shape_cast %30 : vector<1x1x1x512xf32> to vector<1x512xf32>
    %32 = vector.shape_cast %29 : vector<1x512xf32> to vector<1x1x1x512xf32>
    tpu.vector_store %arg5[%c0_26, %c2_27, %c0_28, %c0_29], %32 {strides = array<i32>} : memref<1x3x1x512xf32, #tpu.memory_space<vmem>>, vector<1x1x1x512xf32>,
    return
  }
  func.func @transform_0(%arg0: i32, %arg1: i32) -> (i32, i32) {
    %c1_i32 = arith.constant 1 : i32
    %0 = arith.muli %arg0, %c1_i32 : i32
    %1 = arith.addi %0, %arg1 : i32
    %c1_i32_0 = arith.constant 1 : i32
    %2 = arith.minsi %1, %c1_i32_0 : i32
    %c0_i32 = arith.constant 0 : i32
    %c0_i32_1 = arith.constant 0 : i32
    return %2, %c0_i32 : i32, i32
  }
  func.func @transform_1(%arg0: i32, %arg1: i32) -> (i32, i32) {
    %c1_i32 = arith.constant 1 : i32
    %0 = arith.muli %arg0, %c1_i32 : i32
    %1 = arith.addi %0, %arg1 : i32
    %c1_i32_0 = arith.constant 1 : i32
    %2 = arith.minsi %1, %c1_i32_0 : i32
    %c0_i32 = arith.constant 0 : i32
    %c0_i32_1 = arith.constant 0 : i32
    return %2, %c0_i32 : i32, i32
  }
  func.func @transform_2(%arg0: i32, %arg1: i32) -> (i32, i32) {
    %c1_i32 = arith.constant 1 : i32
    %0 = arith.muli %arg0, %c1_i32 : i32
    %1 = arith.addi %0, %arg1 : i32
    %c1_i32_0 = arith.constant 1 : i32
    %2 = arith.minsi %1, %c1_i32_0 : i32
    %c0_i32 = arith.constant 0 : i32
    %c0_i32_1 = arith.constant 0 : i32
    return %2, %c0_i32 : i32, i32
  }
  func.func @transform_3(%arg0: i32, %arg1: i32) -> (i32, i32, i32, i32) {
    %c0_i32 = arith.constant 0 : i32
    %c0_i32_0 = arith.constant 0 : i32
    %c0_i32_1 = arith.constant 0 : i32
    %c0_i32_2 = arith.constant 0 : i32
    return %arg0, %c0_i32, %c0_i32_0, %c0_i32_1 : i32, i32, i32, i32
  }
}

</mosaic_0001>

<llo_original>
// kernel: squeeze.6
$region0: #{squeeze.6}
  %s0 = inlined_call_operand.vmem [shape: f32[2,1,16,16], index: 0, kind: input, shape index: {}]
  %s1 = inlined_call_operand.vmem [shape: f32[512], index: 1, kind: output, shape index: {}]
  $region1: #{squeeze.6} parent=0
    #allocation0 [shape = 'u8[4096]{0}', space=vmem, size = 0x1000, scoped, tag = 'scoped mem for output reshape']
    %v2 = vld [vmem:[%s0] ss:$8 sm:$0xf]
    %vm3 = vcmask 130048
    %4 = vst.msk [vmem:[#allocation0] sm:$0xf] %vm3, %v2
    %s5 = scalar_lea.vmem %s0, 7
    %v6 = vld [vmem:[%s5] ss:$8 sm:$0xf]
    %7 = vrot.lane.b32.xlu0 %v6, 112
    %v8 = vpop.permute.xlu0 %7
    %vm9 = vcmask 1048448
    %10 = vst.msk [vmem:[#allocation0] sm:$0xf] %vm9, %v8
    %s11 = scalar_lea.vmem %s0, 6
    %v12 = vld [vmem:[%s11] ss:$8 sm:$0xf]
    %13 = vrot.lane.b32.xlu0 %v12, 96
    %v14 = vpop.permute.xlu0 %13
    %vm15 = vcmask 917248
    %16 = vst.msk [vmem:[#allocation0] sm:$0xf] %vm15, %v14
    %s17 = scalar_lea.vmem %s0, 5
    %v18 = vld [vmem:[%s17] ss:$8 sm:$0xf]
    %19 = vrot.lane.b32.xlu0 %v18, 80
    %v20 = vpop.permute.xlu0 %19
    %vm21 = vcmask 786048
    %22 = vst.msk [vmem:[#allocation0] sm:$0xf] %vm21, %v20
    %s23 = scalar_lea.vmem %s0, 4
    %v24 = vld [vmem:[%s23] ss:$8 sm:$0xf]
    %25 = vrot.lane.b32.xlu0 %v24, 64
    %v26 = vpop.permute.xlu0 %25
    %vm27 = vcmask 654848
    %28 = vst.msk [vmem:[#allocation0] sm:$0xf] %vm27, %v26
    %s29 = scalar_lea.vmem %s0, 3
    %v30 = vld [vmem:[%s29] ss:$8 sm:$0xf]
    %31 = vrot.lane.b32.xlu0 %v30, 48
    %v32 = vpop.permute.xlu0 %31
    %vm33 = vcmask 523648
    %34 = vst.msk [vmem:[#allocation0] sm:$0xf] %vm33, %v32
    %s35 = scalar_lea.vmem %s0, 2
    %v36 = vld [vmem:[%s35] ss:$8 sm:$0xf]
    %37 = vrot.lane.b32.xlu0 %v36, 32
    %v38 = vpop.permute.xlu0 %37
    %vm39 = vcmask 392448
    %40 = vst.msk [vmem:[#allocation0] sm:$0xf] %vm39, %v38
    %s41 = scalar_lea.vmem %s0, 1
    %v42 = vld [vmem:[%s41] ss:$8 sm:$0xf]
    %43 = vrot.lane.b32.xlu0 %v42, 16
    %v44 = vpop.permute.xlu0 %43
    %vm45 = vcmask 261248
    %46 = vst.msk [vmem:[#allocation0] sm:$0xf] %vm45, %v44
    %s48 = sshllo.u32 0, 4
    %v50 = vld [vmem:[#allocation0] sm:%s48]
    %s51 = sshllo.u32 0, 4
    %52 = vst [vmem:[%s1] sm:%s51] %v50

// kernel: squeeze.5
$region0: #{squeeze.5}
  %s0 = inlined_call_operand.hbm [shape: f32[2,1,16,16], index: 0, kind: input, shape index: {}]
  %s1 = inlined_call_operand.vmem [shape: f32[512], index: 1, kind: output, shape index: {}]
  $region1: #{squeeze.5} parent=0
    #allocation0 [shape = 'u8[16384]{0}', space=vmem, size = 0x4000, scoped, tag = 'operand span for operand 0']
    #allocation1 [shape = 's32[1]{0}', space=sflag, size = 0x4, scoped, tag = 'scoped memory for squeeze.5']
    #allocation2 [shape = 'u8[4096]{0}', space=vmem, size = 0x1000, scoped, tag = 'scoped mem for output reshape']
    %2 = vsyncpa [#allocation1], 0
    %s4 = ssub.s32 512, 512
    %5 = vsyncadd [#allocation1], %s4
    %s7 = sshll.u32 [#allocation0], 4
    %s8 = int_to_ptr.vmem [resolvable:$true] %s7
    %10 = dma.hbm_to_vmem [thread:$0]  %s0, 512, %s8, [#allocation1]
    %11 = dma.done [#allocation1], 512
    %v12 = vld [vmem:[#allocation0] ss:$8 sm:$0xf]
    %vm13 = vcmask 130048
    %14 = vst.msk [vmem:[#allocation2] sm:$0xf] %vm13, %v12
    %s15 = scalar_lea.vmem [#allocation0], 7
    %v16 = vld [vmem:[%s15] ss:$8 sm:$0xf]
    %17 = vrot.lane.b32.xlu0 %v16, 112
    %v18 = vpop.permute.xlu0 %17
    %vm19 = vcmask 1048448
    %20 = vst.msk [vmem:[#allocation2] sm:$0xf] %vm19, %v18
    %s21 = scalar_lea.vmem [#allocation0], 6
    %v22 = vld [vmem:[%s21] ss:$8 sm:$0xf]
    %23 = vrot.lane.b32.xlu0 %v22, 96
    %v24 = vpop.permute.xlu0 %23
    %vm25 = vcmask 917248
    %26 = vst.msk [vmem:[#allocation2] sm:$0xf] %vm25, %v24
    %s27 = scalar_lea.vmem [#allocation0], 5
    %v28 = vld [vmem:[%s27] ss:$8 sm:$0xf]
    %29 = vrot.lane.b32.xlu0 %v28, 80
    %v30 = vpop.permute.xlu0 %29
    %vm31 = vcmask 786048
    %32 = vst.msk [vmem:[#allocation2] sm:$0xf] %vm31, %v30
    %s33 = scalar_lea.vmem [#allocation0], 4
    %v34 = vld [vmem:[%s33] ss:$8 sm:$0xf]
    %35 = vrot.lane.b32.xlu0 %v34, 64
    %v36 = vpop.permute.xlu0 %35
    %vm37 = vcmask 654848
    %38 = vst.msk [vmem:[#allocation2] sm:$0xf] %vm37, %v36
    %s39 = scalar_lea.vmem [#allocation0], 3
    %v40 = vld [vmem:[%s39] ss:$8 sm:$0xf]
    %41 = vrot.lane.b32.xlu0 %v40, 48
    %v42 = vpop.permute.xlu0 %41
    %vm43 = vcmask 523648
    %44 = vst.msk [vmem:[#allocation2] sm:$0xf] %vm43, %v42
    %s45 = scalar_lea.vmem [#allocation0], 2
    %v46 = vld [vmem:[%s45] ss:$8 sm:$0xf]
    %47 = vrot.lane.b32.xlu0 %v46, 32
    %v48 = vpop.permute.xlu0 %47
    %vm49 = vcmask 392448
    %50 = vst.msk [vmem:[#allocation2] sm:$0xf] %vm49, %v48
    %s51 = scalar_lea.vmem [#allocation0], 1
    %v52 = vld [vmem:[%s51] ss:$8 sm:$0xf]
    %53 = vrot.lane.b32.xlu0 %v52, 16
    %v54 = vpop.permute.xlu0 %53
    %vm55 = vcmask 261248
    %56 = vst.msk [vmem:[#allocation2] sm:$0xf] %vm55, %v54
    %s58 = sshllo.u32 0, 4
    %v60 = vld [vmem:[#allocation2] sm:%s58]
    %s61 = sshllo.u32 0, 4
    %62 = vst [vmem:[%s1] sm:%s61] %v60
    %63 = vsyncpa [#allocation1], 1

// kernel: dice_loss.1
$region0: #{dice_loss.1}
  #allocation0 [shape = 'u32[]', space=smem, size = 0x4, offset = 0x4, fixed_abs, tag = 'smem constant byte address 0x4 - core index']
  #allocation1 [shape = 'u32[144,128]{1,0:T(1,128)}', space=vmem, size = 0x12000, scoped, tag = 'internal scratch']
  %s0 = inlined_call_operand.vmem [shape: f32[64,512], index: 0, kind: input, shape index: {}]
  %s1 = inlined_call_operand.vmem [shape: f32[64,512], index: 1, kind: input, shape index: {}]
  %s2 = inlined_call_operand.vmem [shape: f32[64,512], index: 2, kind: input, shape index: {}]
  %s3 = inlined_call_operand.vmem [shape: f32[2,3,1,512], index: 3, kind: output, shape index: {}]
  %s4 = sld [smem:[#allocation0]]
  $region49: #{dice_loss.1} parent=0
    _
  %s6 = ssub.s32 1, %s4
  %s7 = scalar_select 0, %s6, %s4
  loop: start=0, step=1, limit=4
  $region2: #{dice_loss.1} parent=0 // loop_pre_header
    _
  $region3: #{dice_loss.1} parent=0 // loop_header
    %s9 = sphi 0, %s13
    %p10 = scmp.ge.s32.totalorder %s9, 4
    %s16 = sphi 0, %s28
    %s17 = sphi 0, %s24
    %s18 = sphi 0, %s16
    %s19 = sphi 0, %s17
    %s20 = sphi 0, %s18
    %s21 = sphi 0, %s19
    %s37 = sphi 0, %s39
    %s40 = sphi 0, %s37
    %s41 = sphi 0, %s40
    %s57 = sphi 0, %s41
    %s69 = sphi 0, %s71
    %s72 = sphi 0, %s69
    %s73 = sphi 0, %s72
    %s89 = sphi 0, %s73
    %s101 = sphi 0, %s103
    %s104 = sphi 0, %s101
    %s105 = sphi 0, %s104
    %s121 = sphi 0, %s105
    %s127 = sphi 0, %s129
    %s130 = sphi 0, %s127
    %s131 = sphi 0, %s130
    %s147 = sphi 0, %s131
  $region4: #{dice_loss.1} parent=0 // loop_header_branch
    %12 = sbr.rel (%p10) target = $region8
  $region5: #{dice_loss.1} parent=0 // loop_body
    %s14 = ssub.s32 %s9, 1
    %s15 = ssub.s32 %s9, 2
    %s22 = sadd.s32 1, %s17
    %p23 = scmp.ge.s32.totalorder %s22, 1
    %s24 = scalar_select %p23, 0, %s22
    %s25 = sadd.s32 1, %s16
    %s26 = scalar_select %p23, %s25, %s16
    %p27 = scmp.ge.s32.totalorder %s26, 2
    %s28 = scalar_select %p27, 0, %s26
    %s29 = sadd.s32 %s16, %s17
    %p30 = scmp.lt.s32.totalorder %s29, 1
    %s31 = scalar_select %p30, %s29, 1
    %s32 = sadd.s32 %s28, %s24
    %p33 = scmp.lt.s32.totalorder %s32, 1
    %s34 = scalar_select %p33, %s32, 1
    %s35 = ssub.s32 %s31, %s34
    %p36 = scmp.eq.s32.totalorder %s35, 0
    %s38 = sadd.s32 %s37, 1
    %s39 = scalar_select %p36, %s37, %s38
    %p42 = pneg %p36
    %p43 = scmp.eq.s32.totalorder %s9, 1
    %p44 = por %p42, %p43
    %p45 = scmp.ne.s32.totalorder %s37, %s40
    %p46 = scmp.eq.s32.totalorder %s9, 0
    %p47 = por %p45, %p46
    %p48 = scmp.ne.s32.totalorder %s37, %s40
    %p49 = scmp.eq.s32.totalorder %s14, 1
    %p50 = por %p48, %p49
    %p51 = scmp.ne.s32.totalorder %s40, %s41
    %p52 = scmp.eq.s32.totalorder %s14, 0
    %p53 = por %p51, %p52
    %p54 = scmp.ne.s32.totalorder %s40, %s41
    %p55 = scmp.eq.s32.totalorder %s15, 1
    %p56 = por %p54, %p55
    %p58 = scmp.ne.s32.totalorder %s41, %s57
    %p59 = scmp.eq.s32.totalorder %s15, 0
    %p60 = por %p58, %p59
    %s61 = sadd.s32 %s16, %s17
    %p62 = scmp.lt.s32.totalorder %s61, 1
    %s63 = scalar_select %p62, %s61, 1
    %s64 = sadd.s32 %s28, %s24
    %p65 = scmp.lt.s32.totalorder %s64, 1
    %s66 = scalar_select %p65, %s64, 1
    %s67 = ssub.s32 %s63, %s66
    %p68 = scmp.eq.s32.totalorder %s67, 0
    %s70 = sadd.s32 %s69, 1
    %s71 = scalar_select %p68, %s69, %s70
    %p74 = pneg %p68
    %p75 = scmp.eq.s32.totalorder %s9, 1
    %p76 = por %p74, %p75
    %p77 = scmp.ne.s32.totalorder %s69, %s72
    %p78 = scmp.eq.s32.totalorder %s9, 0
    %p79 = por %p77, %p78
    %p80 = scmp.ne.s32.totalorder %s69, %s72
    %p81 = scmp.eq.s32.totalorder %s14, 1
    %p82 = por %p80, %p81
    %p83 = scmp.ne.s32.totalorder %s72, %s73
    %p84 = scmp.eq.s32.totalorder %s14, 0
    %p85 = por %p83, %p84
    %p86 = scmp.ne.s32.totalorder %s72, %s73
    %p87 = scmp.eq.s32.totalorder %s15, 1
    %p88 = por %p86, %p87
    %p90 = scmp.ne.s32.totalorder %s73, %s89
    %p91 = scmp.eq.s32.totalorder %s15, 0
    %p92 = por %p90, %p91
    %s93 = sadd.s32 %s16, %s17
    %p94 = scmp.lt.s32.totalorder %s93, 1
    %s95 = scalar_select %p94, %s93, 1
    %s96 = sadd.s32 %s28, %s24
    %p97 = scmp.lt.s32.totalorder %s96, 1
    %s98 = scalar_select %p97, %s96, 1
    %s99 = ssub.s32 %s95, %s98
    %p100 = scmp.eq.s32.totalorder %s99, 0
    %s102 = sadd.s32 %s101, 1
    %s103 = scalar_select %p100, %s101, %s102
    %p106 = pneg %p100
    %p107 = scmp.eq.s32.totalorder %s9, 1
    %p108 = por %p106, %p107
    %p109 = scmp.ne.s32.totalorder %s101, %s104
    %p110 = scmp.eq.s32.totalorder %s9, 0
    %p111 = por %p109, %p110
    %p112 = scmp.ne.s32.totalorder %s101, %s104
    %p113 = scmp.eq.s32.totalorder %s14, 1
    %p114 = por %p112, %p113
    %p115 = scmp.ne.s32.totalorder %s104, %s105
    %p116 = scmp.eq.s32.totalorder %s14, 0
    %p117 = por %p115, %p116
    %p118 = scmp.ne.s32.totalorder %s104, %s105
    %p119 = scmp.eq.s32.totalorder %s15, 1
    %p120 = por %p118, %p119
    %p122 = scmp.ne.s32.totalorder %s105, %s121
    %p123 = scmp.eq.s32.totalorder %s15, 0
    %p124 = por %p122, %p123
    %s125 = ssub.s32 %s16, %s28
    %p126 = scmp.eq.s32.totalorder %s125, 0
    %s128 = sadd.s32 %s127, 1
    %s129 = scalar_select %p126, %s127, %s128
    %p132 = pneg %p126
    %p133 = scmp.eq.s32.totalorder %s9, 1
    %p134 = por %p132, %p133
    %p135 = scmp.ne.s32.totalorder %s127, %s130
    %p136 = scmp.eq.s32.totalorder %s9, 0
    %p137 = por %p135, %p136
    %p138 = scmp.ne.s32.totalorder %s127, %s130
    %p139 = scmp.eq.s32.totalorder %s14, 1
    %p140 = por %p138, %p139
    %p141 = scmp.ne.s32.totalorder %s130, %s131
    %p142 = scmp.eq.s32.totalorder %s14, 0
    %p143 = por %p141, %p142
    %p144 = scmp.ne.s32.totalorder %s130, %s131
    %p145 = scmp.eq.s32.totalorder %s15, 1
    %p146 = por %p144, %p145
    %p148 = scmp.ne.s32.totalorder %s131, %s147
    %p149 = scmp.eq.s32.totalorder %s15, 0
    %p150 = por %p148, %p149
    %p151 = scmp.le.s32.totalorder 1, %s9
    %p152 = scmp.lt.s32.totalorder %s9, 3
    %p153 = pnand %p151, %p152
    %p154 = pneg %p153
    // Predicated region
    $region9: #{dice_loss.1} parent=5 // pred_check
      _
    $region10: #{dice_loss.1} parent=5 // pred_check_branch
      %156 = sbr.rel (%p153) target = $region12
    $region11: #{dice_loss.1} parent=5 // pred_region
      %s157 = ssub.s32 %s9, 1
    $region12: #{dice_loss.1} parent=5 // pred_fallthru
      _
    %p158 = scmp.lt.s32.totalorder %s9, 2
    // Predicated region
    $region13: #{dice_loss.1} parent=5 // pred_check
      %p159 = pneg %p158
    $region14: #{dice_loss.1} parent=5 // pred_check_branch
      %161 = sbr.rel (%p159) target = $region16
    $region15: #{dice_loss.1} parent=5 // pred_region
      // Predicated region
      $region17: #{dice_loss.1} parent=15 // pred_check
        %p162 = pneg %p47
      $region18: #{dice_loss.1} parent=15 // pred_check_branch
        %164 = sbr.rel (%p162) target = $region20
      $region19: #{dice_loss.1} parent=15 // pred_region
        %s165 = sadd.s32 %s16, %s17
        %p166 = scmp.lt.s32.totalorder %s165, 1
        %s167 = scalar_select %p166, %s165, 1
        %s168 = smul.u32 4, %s167
        %p169 = scmp.lt.s32.totalorder %s168, 7
        %s170 = scalar_select %p169, %s168, 7
        %s171 = smul.addr %s170, 4
        %s172 = smul.addr %s171, 8
        %s173 = scalar_lea.vmem %s0, %s172
        %s174 = sadd.s32 %s16, %s17
        %p175 = scmp.lt.s32.totalorder %s174, 1
        %s176 = scalar_select %p175, %s174, 1
        %s177 = smul.u32 4, %s176
      $region20: #{dice_loss.1} parent=15 // pred_fallthru
        _
      // Predicated region
      $region21: #{dice_loss.1} parent=15 // pred_check
        %p178 = pneg %p79
      $region22: #{dice_loss.1} parent=15 // pred_check_branch
        %180 = sbr.rel (%p178) target = $region24
      $region23: #{dice_loss.1} parent=15 // pred_region
        %s181 = sadd.s32 %s16, %s17
        %p182 = scmp.lt.s32.totalorder %s181, 1
        %s183 = scalar_select %p182, %s181, 1
        %s184 = smul.u32 4, %s183
        %p185 = scmp.lt.s32.totalorder %s184, 7
        %s186 = scalar_select %p185, %s184, 7
        %s187 = smul.addr %s186, 4
        %s188 = smul.addr %s187, 8
        %s189 = scalar_lea.vmem %s1, %s188
        %s190 = sadd.s32 %s16, %s17
        %p191 = scmp.lt.s32.totalorder %s190, 1
        %s192 = scalar_select %p191, %s190, 1
        %s193 = smul.u32 4, %s192
      $region24: #{dice_loss.1} parent=15 // pred_fallthru
        _
      // Predicated region
      $region25: #{dice_loss.1} parent=15 // pred_check
        %p194 = pneg %p111
      $region26: #{dice_loss.1} parent=15 // pred_check_branch
        %196 = sbr.rel (%p194) target = $region28
      $region27: #{dice_loss.1} parent=15 // pred_region
        %s197 = sadd.s32 %s16, %s17
        %p198 = scmp.lt.s32.totalorder %s197, 1
        %s199 = scalar_select %p198, %s197, 1
        %s200 = smul.u32 4, %s199
        %p201 = scmp.lt.s32.totalorder %s200, 7
        %s202 = scalar_select %p201, %s200, 7
        %s203 = smul.addr %s202, 4
        %s204 = smul.addr %s203, 8
        %s205 = scalar_lea.vmem %s2, %s204
        %s206 = sadd.s32 %s16, %s17
        %p207 = scmp.lt.s32.totalorder %s206, 1
        %s208 = scalar_select %p207, %s206, 1
        %s209 = smul.u32 4, %s208
      $region28: #{dice_loss.1} parent=15 // pred_fallthru
        _
    $region16: #{dice_loss.1} parent=5 // pred_fallthru
      _
    %p210 = scmp.le.s32.totalorder 1, %s9
    %p211 = scmp.lt.s32.totalorder %s9, 3
    %p212 = pnand %p210, %p211
    %p213 = pneg %p212
    // Predicated region
    $region29: #{dice_loss.1} parent=5 // pred_check
      _
    $region30: #{dice_loss.1} parent=5 // pred_check_branch
      %215 = sbr.rel (%p212) target = $region32
    $region31: #{dice_loss.1} parent=5 // pred_region
      %s216 = ssub.s32 %s9, 1
      %s217 = sadd.s32 %s18, %s19
      %p218 = scmp.lt.s32.totalorder %s217, 1
      %s219 = scalar_select %p218, %s217, 1
      %s220 = smul.u32 4, %s219
      %p221 = scmp.lt.s32.totalorder %s220, 7
      %s222 = scalar_select %p221, %s220, 7
      %s223 = smul.addr %s222, 4
      %s224 = smul.addr %s223, 8
      %s225 = scalar_lea.vmem %s0, %s224
      %p226 = pneg %p53
      %p227 = pneg %p50
      %s228 = sadd.s32 %s18, %s19
      %p229 = scmp.lt.s32.totalorder %s228, 1
      %s230 = scalar_select %p229, %s228, 1
      %s231 = smul.u32 4, %s230
      %p232 = scmp.lt.s32.totalorder %s231, 7
      %s233 = scalar_select %p232, %s231, 7
      %s234 = smul.addr %s233, 4
      %s235 = smul.addr %s234, 8
      %s236 = scalar_lea.vmem %s1, %s235
      %p237 = pneg %p85
      %p238 = pneg %p82
      %s239 = sadd.s32 %s18, %s19
      %p240 = scmp.lt.s32.totalorder %s239, 1
      %s241 = scalar_select %p240, %s239, 1
      %s242 = smul.u32 4, %s241
      %p243 = scmp.lt.s32.totalorder %s242, 7
      %s244 = scalar_select %p243, %s242, 7
      %s245 = smul.addr %s244, 4
      %s246 = smul.addr %s245, 8
      %s247 = scalar_lea.vmem %s2, %s246
      %p248 = pneg %p117
      %p249 = pneg %p114
      %p250 = pneg %p143
      %p251 = pneg %p140
      %p252 = scmp.lt.s32.totalorder %s18, 1
      %s253 = scalar_select %p252, %s18, 1
      %s254 = smul.addr %s253, 12
      %s255 = scalar_lea.vmem %s3, %s254
      %s256 = sadd.s32 %s18, %s19
      %p257 = scmp.lt.s32.totalorder %s256, 1
      %s258 = scalar_select %p257, %s256, 1
      %s259 = smul.u32 4, %s258
      %p260 = scmp.lt.s32.totalorder %s259, 7
      %s261 = scalar_select %p260, %s259, 7
      %s262 = smul.addr %s261, 4
      %s263 = smul.addr %s262, 8
      %s264 = scalar_lea.vmem %s0, %s263
      %s265 = sadd.s32 %s18, %s19
      %p266 = scmp.lt.s32.totalorder %s265, 1
      %s267 = scalar_select %p266, %s265, 1
      %s268 = smul.u32 4, %s267
      %s269 = sadd.s32 %s18, %s19
      %p270 = scmp.lt.s32.totalorder %s269, 1
      %s271 = scalar_select %p270, %s269, 1
      %s272 = smul.u32 4, %s271
      %p273 = scmp.lt.s32.totalorder %s272, 7
      %s274 = scalar_select %p273, %s272, 7
      %s275 = smul.addr %s274, 4
      %s276 = smul.addr %s275, 8
      %s277 = scalar_lea.vmem %s1, %s276
      %s278 = sadd.s32 %s18, %s19
      %p279 = scmp.lt.s32.totalorder %s278, 1
      %s280 = scalar_select %p279, %s278, 1
      %s281 = smul.u32 4, %s280
      %s282 = sadd.s32 %s18, %s19
      %p283 = scmp.lt.s32.totalorder %s282, 1
      %s284 = scalar_select %p283, %s282, 1
      %s285 = smul.u32 4, %s284
      %p286 = scmp.lt.s32.totalorder %s285, 7
      %s287 = scalar_select %p286, %s285, 7
      %s288 = smul.addr %s287, 4
      %s289 = smul.addr %s288, 8
      %s290 = scalar_lea.vmem %s2, %s289
      %s291 = sadd.s32 %s18, %s19
      %p292 = scmp.lt.s32.totalorder %s291, 1
      %s293 = scalar_select %p292, %s291, 1
      %s294 = smul.u32 4, %s293
      %p295 = scmp.lt.s32.totalorder %s18, 1
      %s296 = scalar_select %p295, %s18, 1
      %s297 = smul.addr %s296, 12
      %s298 = scalar_lea.vmem %s3, %s297
      %p299 = scmp.eq.s32.totalorder %s19, 0
      // Predicated region
      $region33: #{dice_loss.1} parent=31 // pred_check
        %p300 = pneg %p299
      $region34: #{dice_loss.1} parent=31 // pred_check_branch
        %302 = sbr.rel (%p300) target = $region36
      $region35: #{dice_loss.1} parent=31 // pred_region
        %v303 = vlaneseq
        %vm304 = vcmp.ge.s32.totalorder %v303, 0
        %vm305 = vcmp.lt.s32.totalorder %v303, 512
        %vm306 = vmand %vm304, %vm305
        %307 = vst.msk [vmem:[%s298] sm:$0xf] %vm306, 0.0
        %308 = vst.msk [vmem:[%s298 + $0x4] sm:$0xf] %vm306, 0.0
        %309 = vst.msk [vmem:[%s298 + $0x8] sm:$0xf] %vm306, 0.0
      $region36: #{dice_loss.1} parent=31 // pred_fallthru
        _
      %v310 = vld [vmem:[%s264] sm:$0xff]
      %v311 = vld [vmem:[%s264 + $0x8] sm:$0xff]
      %v312 = vld [vmem:[%s264 + $0x10] sm:$0xff]
      %v313 = vld [vmem:[%s264 + $0x18] sm:$0xff]
      %v314 = vld [vmem:[%s264 + $0x20] sm:$0xff]
      %v315 = vld [vmem:[%s264 + $0x28] sm:$0xff]
      %v316 = vld [vmem:[%s264 + $0x30] sm:$0xff]
      %v317 = vld [vmem:[%s264 + $0x38] sm:$0xff]
      %v318 = vld [vmem:[%s264 + $0x40] sm:$0xff]
      %v319 = vld [vmem:[%s264 + $0x48] sm:$0xff]
      %v320 = vld [vmem:[%s264 + $0x50] sm:$0xff]
      %v321 = vld [vmem:[%s264 + $0x58] sm:$0xff]
      %v322 = vld [vmem:[%s264 + $0x60] sm:$0xff]
      %v323 = vld [vmem:[%s264 + $0x68] sm:$0xff]
      %v324 = vld [vmem:[%s264 + $0x70] sm:$0xff]
      %v325 = vld [vmem:[%s264 + $0x78] sm:$0xff]
      %v326 = vld [vmem:[%s277] sm:$0xff]
      %v327 = vld [vmem:[%s277 + $0x8] sm:$0xff]
      %v328 = vld [vmem:[%s277 + $0x10] sm:$0xff]
      %v329 = vld [vmem:[%s277 + $0x18] sm:$0xff]
      %v330 = vld [vmem:[%s277 + $0x20] sm:$0xff]
      %v331 = vld [vmem:[%s277 + $0x28] sm:$0xff]
      %v332 = vld [vmem:[%s277 + $0x30] sm:$0xff]
      %v333 = vld [vmem:[%s277 + $0x38] sm:$0xff]
      %v334 = vld [vmem:[%s277 + $0x40] sm:$0xff]
      %v335 = vld [vmem:[%s277 + $0x48] sm:$0xff]
      %v336 = vld [vmem:[%s277 + $0x50] sm:$0xff]
      %v337 = vld [vmem:[%s277 + $0x58] sm:$0xff]
      %v338 = vld [vmem:[%s277 + $0x60] sm:$0xff]
      %v339 = vld [vmem:[%s277 + $0x68] sm:$0xff]
      %v340 = vld [vmem:[%s277 + $0x70] sm:$0xff]
      %v341 = vld [vmem:[%s277 + $0x78] sm:$0xff]
      %v342 = vld [vmem:[%s290] sm:$0xff]
      %v343 = vld [vmem:[%s290 + $0x8] sm:$0xff]
      %v344 = vld [vmem:[%s290 + $0x10] sm:$0xff]
      %v345 = vld [vmem:[%s290 + $0x18] sm:$0xff]
      %v346 = vld [vmem:[%s290 + $0x20] sm:$0xff]
      %v347 = vld [vmem:[%s290 + $0x28] sm:$0xff]
      %v348 = vld [vmem:[%s290 + $0x30] sm:$0xff]
      %v349 = vld [vmem:[%s290 + $0x38] sm:$0xff]
      %v350 = vld [vmem:[%s290 + $0x40] sm:$0xff]
      %v351 = vld [vmem:[%s290 + $0x48] sm:$0xff]
      %v352 = vld [vmem:[%s290 + $0x50] sm:$0xff]
      %v353 = vld [vmem:[%s290 + $0x58] sm:$0xff]
      %v354 = vld [vmem:[%s290 + $0x60] sm:$0xff]
      %v355 = vld [vmem:[%s290 + $0x68] sm:$0xff]
      %v356 = vld [vmem:[%s290 + $0x70] sm:$0xff]
      %v357 = vld [vmem:[%s290 + $0x78] sm:$0xff]
      %v358 = vmul.f32 %v310, %v342
      %v359 = vmul.f32 %v311, %v343
      %v360 = vmul.f32 %v312, %v344
      %v361 = vmul.f32 %v313, %v345
      %v362 = vmul.f32 %v314, %v346
      %v363 = vmul.f32 %v315, %v347
      %v364 = vmul.f32 %v316, %v348
      %v365 = vmul.f32 %v317, %v349
      %v366 = vmul.f32 %v318, %v350
      %v367 = vmul.f32 %v319, %v351
      %v368 = vmul.f32 %v320, %v352
      %v369 = vmul.f32 %v321, %v353
      %v370 = vmul.f32 %v322, %v354
      %v371 = vmul.f32 %v323, %v355
      %v372 = vmul.f32 %v324, %v356
      %v373 = vmul.f32 %v325, %v357
      %v374 = vmul.f32 %v326, %v342
      %v375 = vmul.f32 %v327, %v343
      %v376 = vmul.f32 %v328, %v344
      %v377 = vmul.f32 %v329, %v345
      %v378 = vmul.f32 %v330, %v346
      %v379 = vmul.f32 %v331, %v347
      %v380 = vmul.f32 %v332, %v348
      %v381 = vmul.f32 %v333, %v349
      %v382 = vmul.f32 %v334, %v350
      %v383 = vmul.f32 %v335, %v351
      %v384 = vmul.f32 %v336, %v352
      %v385 = vmul.f32 %v337, %v353
      %v386 = vmul.f32 %v338, %v354
      %v387 = vmul.f32 %v339, %v355
      %v388 = vmul.f32 %v340, %v356
      %v389 = vmul.f32 %v341, %v357
      %v390 = vld [vmem:[%s298] sm:$0xf]
      %v391 = vmul.f32 %v358, %v326
      %v392 = vmul.f32 %v359, %v327
      %v393 = vmul.f32 %v360, %v328
      %v394 = vmul.f32 %v361, %v329
      %v395 = vmul.f32 %v362, %v330
      %v396 = vmul.f32 %v363, %v331
      %v397 = vmul.f32 %v364, %v332
      %v398 = vmul.f32 %v365, %v333
      %v399 = vmul.f32 %v366, %v334
      %v400 = vmul.f32 %v367, %v335
      %v401 = vmul.f32 %v368, %v336
      %v402 = vmul.f32 %v369, %v337
      %v403 = vmul.f32 %v370, %v338
      %v404 = vmul.f32 %v371, %v339
      %v405 = vmul.f32 %v372, %v340
      %v406 = vmul.f32 %v373, %v341
      %v407 = vadd.f32 %v391, %v395
      %v408 = vadd.f32 %v407, %v399
      %v409 = vadd.f32 %v408, %v403
      %v410 = vrot.slane %v409, 4
      %v411 = vadd.f32 %v409, %v410
      %v412 = vrot.slane %v411, 2
      %v413 = vadd.f32 %v411, %v412
      %v414 = vrot.slane %v413, 1
      %v415 = vadd.f32 %v413, %v414
      %v416 = vadd.f32 %v392, %v396
      %v417 = vadd.f32 %v416, %v400
      %v418 = vadd.f32 %v417, %v404
      %v419 = vrot.slane %v418, 4
      %v420 = vadd.f32 %v418, %v419
      %v421 = vrot.slane %v420, 2
      %v422 = vadd.f32 %v420, %v421
      %v423 = vrot.slane %v422, 1
      %v424 = vadd.f32 %v422, %v423
      %v425 = vadd.f32 %v393, %v397
      %v426 = vadd.f32 %v425, %v401
      %v427 = vadd.f32 %v426, %v405
      %v428 = vrot.slane %v427, 4
      %v429 = vadd.f32 %v427, %v428
      %v430 = vrot.slane %v429, 2
      %v431 = vadd.f32 %v429, %v430
      %v432 = vrot.slane %v431, 1
      %v433 = vadd.f32 %v431, %v432
      %v434 = vadd.f32 %v394, %v398
      %v435 = vadd.f32 %v434, %v402
      %v436 = vadd.f32 %v435, %v406
      %v437 = vrot.slane %v436, 4
      %v438 = vadd.f32 %v436, %v437
      %v439 = vrot.slane %v438, 2
      %v440 = vadd.f32 %v438, %v439
      %v441 = vrot.slane %v440, 1
      %v442 = vadd.f32 %v440, %v441
      %v447 = vcombine.low %v415, %v424
      %v448 = vcombine.low %v433, %v442
      %v450 = vunpack.c.l.s4 1966171168
      %v451 = vunpack.c.0.s8 %v450
      %v452 = vlaneseq
      %v453 = vshrl.u32 %v452, 7
      %v454 = vsub.s32 %v451, %v453
      %v455 = vrot.slane %v447, %v454
      %v457 = vunpack.c.l.s4 1966171168
      %v458 = vunpack.c.0.s8 %v457
      %v459 = vlaneseq
      %v460 = vshrl.u32 %v459, 7
      %v461 = vsub.s32 %v458, %v460
      %v462 = vrot.slane %v448, %v461
      %v463 = vcombine.low %v455, %v462
      %v465 = vunpack.c.l.s4 1966171168
      %v466 = vunpack.c.0.s8 %v465
      %v467 = vlaneseq
      %v468 = vshrl.u32 %v467, 7
      %v469 = vsub.s32 %v466, %v468
      %v470 = vrot.slane %v463, %v469
      %v472 = vadd.f32 %v390, %v470
      %v473 = vlaneseq
      %vm474 = vcmp.ge.s32.totalorder %v473, 0
      %vm475 = vcmp.lt.s32.totalorder %v473, 512
      %vm476 = vmand %vm474, %vm475
      %477 = vst.msk [vmem:[%s298] sm:$0xf] %vm476, %v472
      %s478 = scalar_lea.vmem %s298, 4
      %v479 = vld [vmem:[%s478] sm:$0xf]
      %v480 = vadd.f32 %v358, %v362
      %v481 = vadd.f32 %v480, %v366
      %v482 = vadd.f32 %v481, %v370
      %v483 = vrot.slane %v482, 4
      %v484 = vadd.f32 %v482, %v483
      %v485 = vrot.slane %v484, 2
      %v486 = vadd.f32 %v484, %v485
      %v487 = vrot.slane %v486, 1
      %v488 = vadd.f32 %v486, %v487
      %v489 = vadd.f32 %v359, %v363
      %v490 = vadd.f32 %v489, %v367
      %v491 = vadd.f32 %v490, %v371
      %v492 = vrot.slane %v491, 4
      %v493 = vadd.f32 %v491, %v492
      %v494 = vrot.slane %v493, 2
      %v495 = vadd.f32 %v493, %v494
      %v496 = vrot.slane %v495, 1
      %v497 = vadd.f32 %v495, %v496
      %v498 = vadd.f32 %v360, %v364
      %v499 = vadd.f32 %v498, %v368
      %v500 = vadd.f32 %v499, %v372
      %v501 = vrot.slane %v500, 4
      %v502 = vadd.f32 %v500, %v501
      %v503 = vrot.slane %v502, 2
      %v504 = vadd.f32 %v502, %v503
      %v505 = vrot.slane %v504, 1
      %v506 = vadd.f32 %v504, %v505
      %v507 = vadd.f32 %v361, %v365
      %v508 = vadd.f32 %v507, %v369
      %v509 = vadd.f32 %v508, %v373
      %v510 = vrot.slane %v509, 4
      %v511 = vadd.f32 %v509, %v510
      %v512 = vrot.slane %v511, 2
      %v513 = vadd.f32 %v511, %v512
      %v514 = vrot.slane %v513, 1
      %v515 = vadd.f32 %v513, %v514
      %v520 = vcombine.low %v488, %v497
      %v521 = vcombine.low %v506, %v515
      %v523 = vunpack.c.l.s4 1966171168
      %v524 = vunpack.c.0.s8 %v523
      %v525 = vlaneseq
      %v526 = vshrl.u32 %v525, 7
      %v527 = vsub.s32 %v524, %v526
      %v528 = vrot.slane %v520, %v527
      %v530 = vunpack.c.l.s4 1966171168
      %v531 = vunpack.c.0.s8 %v530
      %v532 = vlaneseq
      %v533 = vshrl.u32 %v532, 7
      %v534 = vsub.s32 %v531, %v533
      %v535 = vrot.slane %v521, %v534
      %v536 = vcombine.low %v528, %v535
      %v538 = vunpack.c.l.s4 1966171168
      %v539 = vunpack.c.0.s8 %v538
      %v540 = vlaneseq
      %v541 = vshrl.u32 %v540, 7
      %v542 = vsub.s32 %v539, %v541
      %v543 = vrot.slane %v536, %v542
      %v545 = vadd.f32 %v479, %v543
      %546 = vst.msk [vmem:[%s478] sm:$0xf] %vm476, %v545
      %s547 = scalar_lea.vmem %s298, 8
      %v548 = vld [vmem:[%s547] sm:$0xf]
      %v549 = vadd.f32 %v374, %v378
      %v550 = vadd.f32 %v549, %v382
      %v551 = vadd.f32 %v550, %v386
      %v552 = vrot.slane %v551, 4
      %v553 = vadd.f32 %v551, %v552
      %v554 = vrot.slane %v553, 2
      %v555 = vadd.f32 %v553, %v554
      %v556 = vrot.slane %v555, 1
      %v557 = vadd.f32 %v555, %v556
      %v558 = vadd.f32 %v375, %v379
      %v559 = vadd.f32 %v558, %v383
      %v560 = vadd.f32 %v559, %v387
      %v561 = vrot.slane %v560, 4
      %v562 = vadd.f32 %v560, %v561
      %v563 = vrot.slane %v562, 2
      %v564 = vadd.f32 %v562, %v563
      %v565 = vrot.slane %v564, 1
      %v566 = vadd.f32 %v564, %v565
      %v567 = vadd.f32 %v376, %v380
      %v568 = vadd.f32 %v567, %v384
      %v569 = vadd.f32 %v568, %v388
      %v570 = vrot.slane %v569, 4
      %v571 = vadd.f32 %v569, %v570
      %v572 = vrot.slane %v571, 2
      %v573 = vadd.f32 %v571, %v572
      %v574 = vrot.slane %v573, 1
      %v575 = vadd.f32 %v573, %v574
      %v576 = vadd.f32 %v377, %v381
      %v577 = vadd.f32 %v576, %v385
      %v578 = vadd.f32 %v577, %v389
      %v579 = vrot.slane %v578, 4
      %v580 = vadd.f32 %v578, %v579
      %v581 = vrot.slane %v580, 2
      %v582 = vadd.f32 %v580, %v581
      %v583 = vrot.slane %v582, 1
      %v584 = vadd.f32 %v582, %v583
      %v589 = vcombine.low %v557, %v566
      %v590 = vcombine.low %v575, %v584
      %v592 = vunpack.c.l.s4 1966171168
      %v593 = vunpack.c.0.s8 %v592
      %v594 = vlaneseq
      %v595 = vshrl.u32 %v594, 7
      %v596 = vsub.s32 %v593, %v595
      %v597 = vrot.slane %v589, %v596
      %v599 = vunpack.c.l.s4 1966171168
      %v600 = vunpack.c.0.s8 %v599
      %v601 = vlaneseq
      %v602 = vshrl.u32 %v601, 7
      %v603 = vsub.s32 %v600, %v602
      %v604 = vrot.slane %v590, %v603
      %v605 = vcombine.low %v597, %v604
      %v607 = vunpack.c.l.s4 1966171168
      %v608 = vunpack.c.0.s8 %v607
      %v609 = vlaneseq
      %v610 = vshrl.u32 %v609, 7
      %v611 = vsub.s32 %v608, %v610
      %v612 = vrot.slane %v605, %v611
      %v614 = vadd.f32 %v548, %v612
      %615 = vst.msk [vmem:[%s547] sm:$0xf] %vm476, %v614
      %p616 = scmp.lt.s32.totalorder %s18, 1
      %s617 = scalar_select %p616, %s18, 1
      %s618 = smul.addr %s617, 12
      %s619 = scalar_lea.vmem %s3, %s618
      // Predicated region
      $region37: #{dice_loss.1} parent=31 // pred_check
        %p620 = pneg %p140
      $region38: #{dice_loss.1} parent=31 // pred_check_branch
        %622 = sbr.rel (%p620) target = $region40
      $region39: #{dice_loss.1} parent=31 // pred_region
        _
      $region40: #{dice_loss.1} parent=31 // pred_fallthru
        _
    $region32: #{dice_loss.1} parent=5 // pred_fallthru
      _
    %p623 = scmp.le.s32.totalorder 2, %s9
    // Predicated region
    $region41: #{dice_loss.1} parent=5 // pred_check
      %p624 = pneg %p623
    $region42: #{dice_loss.1} parent=5 // pred_check_branch
      %626 = sbr.rel (%p624) target = $region44
    $region43: #{dice_loss.1} parent=5 // pred_region
      %s627 = ssub.s32 %s9, 2
      // Predicated region
      $region45: #{dice_loss.1} parent=43 // pred_check
        %p628 = pneg %p146
      $region46: #{dice_loss.1} parent=43 // pred_check_branch
        %630 = sbr.rel (%p628) target = $region48
      $region47: #{dice_loss.1} parent=43 // pred_region
        %p631 = scmp.lt.s32.totalorder %s20, 1
        %s632 = scalar_select %p631, %s20, 1
        %s633 = smul.addr %s632, 12
        %s634 = scalar_lea.vmem %s3, %s633
      $region48: #{dice_loss.1} parent=43 // pred_fallthru
        _
    $region44: #{dice_loss.1} parent=5 // pred_fallthru
      _
  $region6: #{dice_loss.1} parent=0 // loop_footer
    %s13 = sadd.s32 1, %s9
  $region7: #{dice_loss.1} parent=0 // loop_footer_branch
    %8 = sbr.rel target = $region3
  $region8: #{dice_loss.1} parent=0 // loop_exit
    _

</llo_original>
